<compile_context>
chip_gen: v5e
topology: v5e:2x2
jax: 0.10.0
libtpu: 0.0.40
codegen_flags: <defaults>
</compile_context>

<pallas_src>
import functools

import jax
import jax.numpy as jnp
from jax import lax
from jax.experimental import pallas as pl
from jax.experimental.pallas import tpu as pltpu

LANE = 128


def _round_up(n, m):
    return ((n + m - 1) // m) * m


def _pad_cols(x, cols):
    return jnp.pad(x, ((0, 0), (0, cols - x.shape[1])))


def _pad_to(x, rows, cols):
    return jnp.pad(x, ((0, rows - x.shape[0]), (0, cols - x.shape[1])))


# ---------------------------------------------------------------------------
# Kernel 1: encoder (Linear + ReLU) + decoder.init_state (mean-pool over the
# encoder sequence) + once-per-batch context projection (context @ Wd1c + bd1).
# Grid: encoder-row tiles ("arbitrary"), accumulating into a f32 VMEM scratch.
# ---------------------------------------------------------------------------
def encoder_context_kernel(enc_x_ref, we_ref, wd1c_ref, bias_ref,
                           ctx_ref, acc_ref, *, B, Se, TE, Hp):
    t = pl.program_id(0)

    @pl.when(t == 0)
    def _():
        acc_ref[...] = jnp.zeros_like(acc_ref)

    # Encoder: cast the unpadded f32 activation tile to bf16 in VMEM,
    # MXU matmul with f32 accumulation, bias + ReLU fused, live as bf16 after.
    be = bias_ref[:, :Hp]
    enc_h = jnp.dot(enc_x_ref[...].astype(jnp.bfloat16), we_ref[...],
                    preferred_element_type=jnp.float32)           # (TE, Hp)
    enc_h = jnp.maximum(enc_h + be, 0.0).astype(jnp.bfloat16)

    # Partial mean-pool of this row tile as a tiny MXU matmul. pool[b, r] = 1
    # iff global row t*TE + r belongs to batch b (rows are (B, Se)-flattened);
    # built from iota so no operand DMA is needed. Padded rows (>= B*Se) never
    # match a batch and contribute zero.
    row = t * TE + lax.broadcasted_iota(jnp.int32, (B, TE), 1)
    lo = lax.broadcasted_iota(jnp.int32, (B, TE), 0) * Se
    pool = jnp.where((row >= lo) & (row < lo + Se), 1.0, 0.0).astype(jnp.bfloat16)
    acc_ref[...] += jnp.dot(pool, enc_h, preferred_element_type=jnp.float32)

    @pl.when(t == pl.num_programs(0) - 1)
    def _():
        bd1 = bias_ref[:, Hp:2 * Hp]
        context = (acc_ref[...] * (1.0 / Se)).astype(jnp.bfloat16)  # (B, Hp)
        ctx_proj = jnp.dot(context, wd1c_ref[...],
                           preferred_element_type=jnp.float32) + bd1
        ctx_ref[...] = ctx_proj.astype(ctx_ref.dtype)


# ---------------------------------------------------------------------------
# Kernel 2: decoder layer 1 (split-concat matmul; context branch already
# projected + bias-folded in kernel 1) + output projection, bf16 output.
# Grid: decoder-row tiles, "parallel".
# ---------------------------------------------------------------------------
def decoder_kernel(dec_x_ref, ctx_ref, wd1x_ref, wd2_ref, bias_ref,
                   out_ref, *, B, Sd, TD, Hp):
    i = pl.program_id(0)

    # One-hot row -> batch broadcast of the context projection, realized as an
    # MXU matmul built from iota (no operand DMA, no cross-sublane broadcast).
    row = i * TD + lax.broadcasted_iota(jnp.int32, (TD, B), 0)
    lo = lax.broadcasted_iota(jnp.int32, (TD, B), 1) * Sd
    expand = jnp.where((row >= lo) & (row < lo + Sd), 1.0, 0.0).astype(jnp.bfloat16)

    h = jnp.dot(dec_x_ref[...].astype(jnp.bfloat16), wd1x_ref[...],
                preferred_element_type=jnp.float32)               # (TD, Hp)
    h = h + jnp.dot(expand, ctx_ref[...], preferred_element_type=jnp.float32)
    h = jnp.maximum(h, 0.0).astype(jnp.bfloat16)

    bd2 = bias_ref[:, 2 * Hp:]
    out = jnp.dot(h, wd2_ref[...], preferred_element_type=jnp.float32) + bd2
    out_ref[...] = out.astype(out_ref.dtype)                      # bf16 store


# ---------------------------------------------------------------------------
# Wrapper
# ---------------------------------------------------------------------------
def prepare_params(params):
    """Pad weight N dims to 128 lanes, cast MXU weights to bf16, pack biases.

    Runs once per model, not per forward call.
    """
    De, H = params["we"].shape
    Dd = params["wd1x"].shape[0]
    V = params["wd2"].shape[1]
    Hp = _round_up(H, LANE)
    Vp = _round_up(V, LANE)
    biases = jnp.concatenate(
        [_pad_cols(params["be"], Hp),
         _pad_cols(params["bd1"], Hp),
         _pad_cols(params["bd2"], Vp)], axis=1).astype(jnp.float32)
    return {
        "we": _pad_cols(params["we"], Hp).astype(jnp.bfloat16),        # (De, Hp)
        "wd1x": _pad_cols(params["wd1x"], Hp).astype(jnp.bfloat16),    # (Dd, Hp)
        "wd1c": _pad_to(params["wd1c"], Hp, Hp).astype(jnp.bfloat16),  # (Hp, Hp)
        "wd2": _pad_to(params["wd2"], Hp, Vp).astype(jnp.bfloat16),    # (Hp, Vp)
        "biases": biases,                                              # (1, 2Hp+Vp)
        "dims": (De, Dd, H, V, Hp, Vp),
    }


def encoder_decoder(enc_x, dec_x, prep, *, enc_tile=8, dec_tile=16):
    De, Dd, H, V, Hp, Vp = prep["dims"]
    B, Se, _ = enc_x.shape
    _, Sd, _ = dec_x.shape

    # Flatten (B, S) into the matmul M dim; keep the natural (unpadded) K dim,
    # pad rows only up to the row tile so block shapes divide evenly.
    Me, Md = B * Se, B * Sd
    TE = min(enc_tile, Me)
    TD = min(dec_tile, Md)
    Me_p = _round_up(Me, TE)
    Md_p = _round_up(Md, TD)
    enc_x_f = _pad_to(enc_x.reshape(Me, De).astype(jnp.float32), Me_p, De)
    dec_x_f = _pad_to(dec_x.reshape(Md, Dd).astype(jnp.float32), Md_p, Dd)

    bias_w = 2 * Hp + Vp

    # ---- pallas_call 1: encoder + mean-pool context + context projection ----
    ctx = pl.pallas_call(
        functools.partial(encoder_context_kernel, B=B, Se=Se, TE=TE, Hp=Hp),
        out_shape=jax.ShapeDtypeStruct((B, Hp), jnp.bfloat16),
        grid_spec=pltpu.PrefetchScalarGridSpec(
            num_scalar_prefetch=0,
            grid=(Me_p // TE,),
            in_specs=[
                pl.BlockSpec((TE, De), lambda t: (t, 0)),
                pl.BlockSpec((De, Hp), lambda t: (0, 0)),
                pl.BlockSpec((Hp, Hp), lambda t: (0, 0)),
                pl.BlockSpec((1, bias_w), lambda t: (0, 0)),
            ],
            out_specs=pl.BlockSpec((B, Hp), lambda t: (0, 0)),
            scratch_shapes=[pltpu.VMEM((B, Hp), jnp.float32)],
        ),
        compiler_params=pltpu.CompilerParams(
            dimension_semantics=("arbitrary",)),
    )(enc_x_f, prep["we"], prep["wd1c"], prep["biases"])

    # ---- pallas_call 2: decoder layer 1 + output projection ----
    out_p = pl.pallas_call(
        functools.partial(decoder_kernel, B=B, Sd=Sd, TD=TD, Hp=Hp),
        out_shape=jax.ShapeDtypeStruct((Md_p, Vp), jnp.bfloat16),
        grid_spec=pltpu.PrefetchScalarGridSpec(
            num_scalar_prefetch=0,
            grid=(Md_p // TD,),
            in_specs=[
                pl.BlockSpec((TD, Dd), lambda i: (i, 0)),
                pl.BlockSpec((B, Hp), lambda i: (0, 0)),
                pl.BlockSpec((Dd, Hp), lambda i: (0, 0)),
                pl.BlockSpec((Hp, Vp), lambda i: (0, 0)),
                pl.BlockSpec((1, bias_w), lambda i: (0, 0)),
            ],
            out_specs=pl.BlockSpec((TD, Vp), lambda i: (i, 0)),
        ),
        compiler_params=pltpu.CompilerParams(
            dimension_semantics=("parallel",)),
    )(dec_x_f, ctx, prep["wd1x"], prep["wd2"], prep["biases"])

    # Strip row / feature padding, restore (B, Sd, V).
    return out_p[:Md, :V].reshape(B, Sd, V)


def init_params(key, De, Dd, H, V):
    ks = jax.random.split(key, 5)
    scale = 0.1
    return {
        "we":   scale * jax.random.normal(ks[0], (De, H), jnp.float32),
        "be":   jnp.zeros((1, H), jnp.float32),
        "wd1x": scale * jax.random.normal(ks[1], (Dd, H), jnp.float32),
        "wd1c": scale * jax.random.normal(ks[2], (H, H), jnp.float32),
        "bd1":  jnp.zeros((1, H), jnp.float32),
        "wd2":  scale * jax.random.normal(ks[3], (H, V), jnp.float32),
        "bd2":  jnp.zeros((1, V), jnp.float32),
    }


def reference(enc_x, dec_x, p):
    # Pure-JAX f32 reference of the same encoder/decoder instantiation.
    enc_h = jnp.maximum(jnp.einsum("bsd,dh->bsh", enc_x, p["we"]) + p["be"][None], 0.0)
    ctx = jnp.mean(enc_h, axis=1)
    h = jnp.maximum(
        jnp.einsum("bsd,dh->bsh", dec_x, p["wd1x"])
        + (ctx @ p["wd1c"])[:, None, :]
        + p["bd1"][None],
        0.0,
    )
    return jnp.einsum("bsh,hv->bsv", h, p["wd2"]) + p["bd2"][None]


if __name__ == "__main__":
    B, Se, Sd = 2, 8, 16
    De, Dd, H, V = 16, 16, 32, 32

    key = jax.random.PRNGKey(0)
    k_enc, k_dec, k_par = jax.random.split(key, 3)

    enc_x = jax.random.normal(k_enc, (B, Se, De), jnp.float32)
    dec_x = jax.random.normal(k_dec, (B, Sd, Dd), jnp.float32)
    params = init_params(k_par, De, Dd, H, V)

    prep = prepare_params(params)           # once per model, not per call
    out = encoder_decoder(enc_x, dec_x, prep)
    out = jax.block_until_ready(out)

    ref = reference(enc_x, dec_x, params)
    assert out.shape == (B, Sd, V) and out.dtype == jnp.bfloat16
    err = float(jnp.max(jnp.abs(out.astype(jnp.float32) - ref)))
    # Kernel feeds the MXU bf16 operands (f32 accumulation) and stores bf16;
    # the reference is pure f32, so compare with loose tolerance.
    assert jnp.allclose(out.astype(jnp.float32), ref, atol=3e-2, rtol=3e-2), err

    print("KERNEL_OK")
</pallas_src>

<mosaic_0001>
module attributes {stable_mosaic.version = 11 : i64} {
  func.func @encoder_context_kernel(%arg0: i32, %arg1: memref<8x16xf32, #tpu.memory_space<vmem>>, %arg2: memref<16x128xbf16, #tpu.memory_space<vmem>>, %arg3: memref<128x128xbf16, #tpu.memory_space<vmem>>, %arg4: memref<1x384xf32, #tpu.memory_space<vmem>>, %arg5: memref<2x128xbf16, #tpu.memory_space<vmem>>, %arg6: memref<2x128xf32, #tpu.memory_space<vmem>>) attributes {dimension_semantics = [#tpu.dimension_semantics<arbitrary>], iteration_bounds = array<i64: 2>, scalar_prefetch = 0 : i64, scratch_operands = 1 : i64, tpu.core_type = #tpu.core_type<tc>, window_params = [{transform_indices = @transform_0, window_bounds = array<i64: 8, 16>}, {pipeline_mode = #tpu.pipeline_mode<synchronous>, transform_indices = @transform_1, window_bounds = array<i64: 16, 128>}, {pipeline_mode = #tpu.pipeline_mode<synchronous>, transform_indices = @transform_2, window_bounds = array<i64: 128, 128>}, {pipeline_mode = #tpu.pipeline_mode<synchronous>, transform_indices = @transform_3, window_bounds = array<i64: 1, 384>}, {pipeline_mode = #tpu.pipeline_mode<synchronous>, transform_indices = @transform_4, window_bounds = array<i64: 2, 128>}]} {
    %c0_i32 = arith.constant 0 : i32
    %0 = arith.cmpi eq, %arg0, %c0_i32 : i32
    %1 = arith.extui %0 : i1 to i32
    %c0_i32_0 = arith.constant 0 : i32
    %2 = arith.cmpi ne, %1, %c0_i32_0 : i32
    scf.if %2 {
      %cst_17 = arith.constant 0.000000e+00 : f32
      %36 = vector.broadcast %cst_17 : f32 to vector<2x128xf32>
      %c0_18 = arith.constant 0 : index
      %c0_19 = arith.constant 0 : index
      %37 = vector.load %arg6[%c0_18, %c0_19] : memref<2x128xf32, #tpu.memory_space<vmem>>, vector<2x128xf32>
      tpu.vector_store %arg6[%c0_18, %c0_19], %36 {strides = array<i32>} : memref<2x128xf32, #tpu.memory_space<vmem>>, vector<2x128xf32>,
    } else {
    }
    %c0 = arith.constant 0 : index
    %c0_1 = arith.constant 0 : index
    %3 = vector.load %arg4[%c0, %c0_1] : memref<1x384xf32, #tpu.memory_space<vmem>>, vector<1x128xf32>
    %c0_2 = arith.constant 0 : index
    %c0_3 = arith.constant 0 : index
    %4 = vector.load %arg1[%c0_2, %c0_3] : memref<8x16xf32, #tpu.memory_space<vmem>>, vector<8x16xf32>
    %5 = arith.truncf %4 : vector<8x16xf32> to vector<8x16xbf16>
    %c0_4 = arith.constant 0 : index
    %c0_5 = arith.constant 0 : index
    %6 = vector.load %arg2[%c0_4, %c0_5] : memref<16x128xbf16, #tpu.memory_space<vmem>>, vector<16x128xbf16>
    %cst = arith.constant dense<0.000000e+00> : vector<8x128xf32>
    %7 = tpu.matmul %5, %6, %cst {dimension_numbers = #tpu.dot_dimension_numbers<[1], [0], [0], [1], [0, 0, 1, 1], [], []>} : vector<8x16xbf16>, vector<16x128xbf16>, vector<8x128xf32> -> vector<8x128xf32>
    %8 = vector.broadcast %3 : vector<1x128xf32> to vector<8x128xf32>
    %9 = arith.addf %7, %8 : vector<8x128xf32>
    %cst_6 = arith.constant 0.000000e+00 : f32
    %10 = vector.broadcast %cst_6 : f32 to vector<8x128xf32>
    %11 = arith.maximumf %9, %10 : vector<8x128xf32>
    %12 = arith.truncf %11 : vector<8x128xf32> to vector<8x128xbf16>
    %c8_i32 = arith.constant 8 : i32
    %13 = arith.muli %arg0, %c8_i32 : i32
    %14 = tpu.iota {dimensions = array<i32: 1>} : vector<2x8xi32>
    %15 = vector.broadcast %13 : i32 to vector<2x8xi32>
    %16 = arith.addi %15, %14 : vector<2x8xi32>
    %17 = tpu.iota {dimensions = array<i32: 0>} : vector<2x8xi32>
    %c8_i32_7 = arith.constant 8 : i32
    %18 = vector.broadcast %c8_i32_7 : i32 to vector<2x8xi32>
    %19 = arith.muli %17, %18 : vector<2x8xi32>
    %20 = arith.cmpi sge, %16, %19 : vector<2x8xi32>
    %c8_i32_8 = arith.constant 8 : i32
    %21 = vector.broadcast %c8_i32_8 : i32 to vector<2x8xi32>
    %22 = arith.addi %19, %21 : vector<2x8xi32>
    %23 = arith.cmpi slt, %16, %22 : vector<2x8xi32>
    %24 = arith.andi %20, %23 : vector<2x8xi1>
    %cst_9 = arith.constant 1.000000e+00 : f32
    %cst_10 = arith.constant 0.000000e+00 : f32
    %25 = vector.broadcast %cst_9 : f32 to vector<2x8xf32>
    %26 = vector.broadcast %cst_10 : f32 to vector<2x8xf32>
    %27 = arith.select %24, %25, %26 : vector<2x8xi1>, vector<2x8xf32>
    %28 = arith.truncf %27 : vector<2x8xf32> to vector<2x8xbf16>
    %c0_11 = arith.constant 0 : index
    %c0_12 = arith.constant 0 : index
    %29 = vector.load %arg6[%c0_11, %c0_12] : memref<2x128xf32, #tpu.memory_space<vmem>>, vector<2x128xf32>
    %cst_13 = arith.constant dense<0.000000e+00> : vector<2x128xf32>
    %30 = tpu.matmul %28, %12, %cst_13 {dimension_numbers = #tpu.dot_dimension_numbers<[1], [0], [0], [1], [0, 0, 1, 1], [], []>} : vector<2x8xbf16>, vector<8x128xbf16>, vector<2x128xf32> -> vector<2x128xf32>
    %31 = arith.addf %29, %30 : vector<2x128xf32>
    %c0_14 = arith.constant 0 : index
    %c0_15 = arith.constant 0 : index
    %32 = vector.load %arg6[%c0_14, %c0_15] : memref<2x128xf32, #tpu.memory_space<vmem>>, vector<2x128xf32>
    tpu.vector_store %arg6[%c0_14, %c0_15], %31 {strides = array<i32>} : memref<2x128xf32, #tpu.memory_space<vmem>>, vector<2x128xf32>,
    %c1_i32 = arith.constant 1 : i32
    %33 = arith.cmpi eq, %arg0, %c1_i32 : i32
    %34 = arith.extui %33 : i1 to i32
    %c0_i32_16 = arith.constant 0 : i32
    %35 = arith.cmpi ne, %34, %c0_i32_16 : i32
    scf.if %35 {
      %c0_17 = arith.constant 0 : index
      %c128 = arith.constant 128 : index
      %36 = vector.load %arg4[%c0_17, %c128] : memref<1x384xf32, #tpu.memory_space<vmem>>, vector<1x128xf32>
      %c0_18 = arith.constant 0 : index
      %c0_19 = arith.constant 0 : index
      %37 = vector.load %arg6[%c0_18, %c0_19] : memref<2x128xf32, #tpu.memory_space<vmem>>, vector<2x128xf32>
      %cst_20 = arith.constant 1.250000e-01 : f32
      %38 = vector.broadcast %cst_20 : f32 to vector<2x128xf32>
      %39 = arith.mulf %37, %38 : vector<2x128xf32>
      %40 = arith.truncf %39 : vector<2x128xf32> to vector<2x128xbf16>
      %c0_21 = arith.constant 0 : index
      %c0_22 = arith.constant 0 : index
      %41 = vector.load %arg3[%c0_21, %c0_22] : memref<128x128xbf16, #tpu.memory_space<vmem>>, vector<128x128xbf16>
      %cst_23 = arith.constant dense<0.000000e+00> : vector<2x128xf32>
      %42 = tpu.matmul %40, %41, %cst_23 {dimension_numbers = #tpu.dot_dimension_numbers<[1], [0], [0], [1], [0, 0, 1, 1], [], []>} : vector<2x128xbf16>, vector<128x128xbf16>, vector<2x128xf32> -> vector<2x128xf32>
      %43 = vector.broadcast %36 : vector<1x128xf32> to vector<2x128xf32>
      %44 = arith.addf %42, %43 : vector<2x128xf32>
      %45 = arith.truncf %44 : vector<2x128xf32> to vector<2x128xbf16>
      %c0_24 = arith.constant 0 : index
      %c0_25 = arith.constant 0 : index
      %46 = vector.load %arg5[%c0_24, %c0_25] : memref<2x128xbf16, #tpu.memory_space<vmem>>, vector<2x128xbf16>
      tpu.vector_store %arg5[%c0_24, %c0_25], %45 {strides = array<i32>} : memref<2x128xbf16, #tpu.memory_space<vmem>>, vector<2x128xbf16>,
    } else {
    }
    return
  }
  func.func @transform_0(%arg0: i32) -> (i32, i32) {
    %c0_i32 = arith.constant 0 : i32
    %c0_i32_0 = arith.constant 0 : i32
    return %arg0, %c0_i32 : i32, i32
  }
  func.func @transform_1(%arg0: i32) -> (i32, i32) {
    %c0_i32 = arith.constant 0 : i32
    %c0_i32_0 = arith.constant 0 : i32
    %c0_i32_1 = arith.constant 0 : i32
    return %c0_i32, %c0_i32_0 : i32, i32
  }
  func.func @transform_2(%arg0: i32) -> (i32, i32) {
    %c0_i32 = arith.constant 0 : i32
    %c0_i32_0 = arith.constant 0 : i32
    %c0_i32_1 = arith.constant 0 : i32
    return %c0_i32, %c0_i32_0 : i32, i32
  }
  func.func @transform_3(%arg0: i32) -> (i32, i32) {
    %c0_i32 = arith.constant 0 : i32
    %c0_i32_0 = arith.constant 0 : i32
    %c0_i32_1 = arith.constant 0 : i32
    return %c0_i32, %c0_i32_0 : i32, i32
  }
  func.func @transform_4(%arg0: i32) -> (i32, i32) {
    %c0_i32 = arith.constant 0 : i32
    %c0_i32_0 = arith.constant 0 : i32
    %c0_i32_1 = arith.constant 0 : i32
    return %c0_i32, %c0_i32_0 : i32, i32
  }
}

</mosaic_0001>

<llo_original>
// kernel: tpu_custom_call.1
$region0: #{tpu_custom_call.1}
  #allocation0 [shape = 'u32[]', space=smem, size = 0x4, offset = 0x4, fixed_abs, tag = 'smem constant byte address 0x4 - core index']
  #allocation1 [shape = 'u32[72,128]{1,0:T(1,128)}', space=vmem, size = 0x9000, scoped, tag = 'internal scratch']
  #allocation2 [shape = 'f32[2,128]{1,0:T(2,128)}', space=vmem, size = 0x400, scoped, tag = 'scratch operand']
  %s0 = inlined_call_operand.hbm [shape: f32[16,16], index: 0, kind: input, shape index: {}]
  %s1 = inlined_call_operand.hbm [shape: bf16[16,128], index: 1, kind: input, shape index: {}]
  %s2 = inlined_call_operand.hbm [shape: bf16[128,128], index: 2, kind: input, shape index: {}]
  %s3 = inlined_call_operand.hbm [shape: f32[1,384], index: 3, kind: input, shape index: {}]
  %s4 = inlined_call_operand.hbm [shape: bf16[2,128], index: 4, kind: output, shape index: {}]
  %s5 = sld [smem:[#allocation0]]
  $region73: #{tpu_custom_call.1} parent=0
    _
  %s7 = ssub.s32 1, %s5
  %s8 = scalar_select 0, %s7, %s5
  $region1: #{tpu_custom_call.1} parent=0
    #allocation3 [shape = 'u8[8192]{0}', space=vmem, size = 0x2000, scoped, tag = 'input window, operand 0']
    #allocation4 [shape = 's32[2]{0}', space=sflag, size = 0x8, scoped, tag = 'scoped memory for tpu_custom_call.1']
    #allocation5 [shape = 's32[2]{0}', space=sflag, size = 0x8, scoped, tag = 'scoped memory for tpu_custom_call.1']
    #allocation6 [shape = 'u8[4096]{0}', space=vmem, size = 0x1000, scoped, tag = 'input window, operand 1, single buffered']
    #allocation7 [shape = 's32[1]{0}', space=sflag, size = 0x4, scoped, tag = 'scoped memory for tpu_custom_call.1']
    #allocation8 [shape = 'u8[32768]{0}', space=vmem, size = 0x8000, scoped, tag = 'input window, operand 2, single buffered']
    #allocation9 [shape = 'u8[1536]{0}', space=vmem, size = 0x800, scoped, tag = 'input window, operand 3, single buffered']
    #allocation10 [shape = 's32[1]{0}', space=sflag, size = 0x4, scoped, tag = 'scoped memory for tpu_custom_call.1']
    #allocation11 [shape = 'u8[512]{0}', space=vmem, size = 0x400, scoped, tag = 'output window, operand 0, single buffered']
    %9 = vsyncpa [#allocation4], 0
    %s10 = scalar_lea.sflag [#allocation4], 1
    %11 = vsyncpa %s10, 0
    %12 = vsyncpa [#allocation7], 0
    %13 = vsyncpa [#allocation10], 0
    %14 = vsyncpa [#allocation5], 0
    loop: start=0, step=1, limit=4
    $region2: #{tpu_custom_call.1} parent=1 // loop_pre_header
      _
    $region3: #{tpu_custom_call.1} parent=1 // loop_header
      %s16 = sphi 0, %s20
      %p17 = scmp.ge.s32.totalorder %s16, 4
      %s26 = sphi 0, %s28
      %s29 = sphi 0, %s26
      %s30 = sphi 0, %s29
      %s46 = sphi 0, %s30
      %s50 = sphi 0, %s50
      %s52 = sphi 0, %s50
      %s53 = sphi 0, %s52
      %s67 = sphi 0, %s53
      %s71 = sphi 0, %s71
      %s73 = sphi 0, %s71
      %s74 = sphi 0, %s73
      %s88 = sphi 0, %s74
      %s92 = sphi 0, %s92
      %s94 = sphi 0, %s92
      %s95 = sphi 0, %s94
      %s109 = sphi 0, %s95
      %s113 = sphi 0, %s113
      %s115 = sphi 0, %s113
      %s116 = sphi 0, %s115
      %s130 = sphi 0, %s116
    $region4: #{tpu_custom_call.1} parent=1 // loop_header_branch
      %19 = sbr.rel (%p17) target = $region8
    $region5: #{tpu_custom_call.1} parent=1 // loop_body
      %s21 = ssub.s32 %s16, 1
      %s22 = ssub.s32 %s16, 2
      %s23 = sadd.s32 %s16, 1
      %s24 = ssub.s32 %s16, %s23
      %p25 = scmp.eq.s32.totalorder %s24, 0
      %s27 = sadd.s32 %s26, 1
      %s28 = scalar_select %p25, %s26, %s27
      %p31 = pneg %p25
      %p32 = scmp.eq.s32.totalorder %s16, 1
      %p33 = por %p31, %p32
      %p34 = scmp.ne.s32.totalorder %s26, %s29
      %p35 = scmp.eq.s32.totalorder %s16, 0
      %p36 = por %p34, %p35
      %p37 = scmp.ne.s32.totalorder %s26, %s29
      %p38 = scmp.eq.s32.totalorder %s21, 1
      %p39 = por %p37, %p38
      %p40 = scmp.ne.s32.totalorder %s29, %s30
      %p41 = scmp.eq.s32.totalorder %s21, 0
      %p42 = por %p40, %p41
      %p43 = scmp.ne.s32.totalorder %s29, %s30
      %p44 = scmp.eq.s32.totalorder %s22, 1
      %p45 = por %p43, %p44
      %p47 = scmp.ne.s32.totalorder %s30, %s46
      %p48 = scmp.eq.s32.totalorder %s22, 0
      %p49 = por %p47, %p48
      %s51 = sadd.s32 %s50, 1
      %p54 = scmp.eq.s32.totalorder %s16, 1
      %p55 = scmp.ne.s32.totalorder %s50, %s52
      %p56 = scmp.eq.s32.totalorder %s16, 0
      %p57 = por %p55, %p56
      %p58 = scmp.ne.s32.totalorder %s50, %s52
      %p59 = scmp.eq.s32.totalorder %s21, 1
      %p60 = por %p58, %p59
      %p61 = scmp.ne.s32.totalorder %s52, %s53
      %p62 = scmp.eq.s32.totalorder %s21, 0
      %p63 = por %p61, %p62
      %p64 = scmp.ne.s32.totalorder %s52, %s53
      %p65 = scmp.eq.s32.totalorder %s22, 1
      %p66 = por %p64, %p65
      %p68 = scmp.ne.s32.totalorder %s53, %s67
      %p69 = scmp.eq.s32.totalorder %s22, 0
      %p70 = por %p68, %p69
      %s72 = sadd.s32 %s71, 1
      %p75 = scmp.eq.s32.totalorder %s16, 1
      %p76 = scmp.ne.s32.totalorder %s71, %s73
      %p77 = scmp.eq.s32.totalorder %s16, 0
      %p78 = por %p76, %p77
      %p79 = scmp.ne.s32.totalorder %s71, %s73
      %p80 = scmp.eq.s32.totalorder %s21, 1
      %p81 = por %p79, %p80
      %p82 = scmp.ne.s32.totalorder %s73, %s74
      %p83 = scmp.eq.s32.totalorder %s21, 0
      %p84 = por %p82, %p83
      %p85 = scmp.ne.s32.totalorder %s73, %s74
      %p86 = scmp.eq.s32.totalorder %s22, 1
      %p87 = por %p85, %p86
      %p89 = scmp.ne.s32.totalorder %s74, %s88
      %p90 = scmp.eq.s32.totalorder %s22, 0
      %p91 = por %p89, %p90
      %s93 = sadd.s32 %s92, 1
      %p96 = scmp.eq.s32.totalorder %s16, 1
      %p97 = scmp.ne.s32.totalorder %s92, %s94
      %p98 = scmp.eq.s32.totalorder %s16, 0
      %p99 = por %p97, %p98
      %p100 = scmp.ne.s32.totalorder %s92, %s94
      %p101 = scmp.eq.s32.totalorder %s21, 1
      %p102 = por %p100, %p101
      %p103 = scmp.ne.s32.totalorder %s94, %s95
      %p104 = scmp.eq.s32.totalorder %s21, 0
      %p105 = por %p103, %p104
      %p106 = scmp.ne.s32.totalorder %s94, %s95
      %p107 = scmp.eq.s32.totalorder %s22, 1
      %p108 = por %p106, %p107
      %p110 = scmp.ne.s32.totalorder %s95, %s109
      %p111 = scmp.eq.s32.totalorder %s22, 0
      %p112 = por %p110, %p111
      %s114 = sadd.s32 %s113, 1
      %p117 = scmp.eq.s32.totalorder %s16, 1
      %p118 = scmp.ne.s32.totalorder %s113, %s115
      %p119 = scmp.eq.s32.totalorder %s16, 0
      %p120 = por %p118, %p119
      %p121 = scmp.ne.s32.totalorder %s113, %s115
      %p122 = scmp.eq.s32.totalorder %s21, 1
      %p123 = por %p121, %p122
      %p124 = scmp.ne.s32.totalorder %s115, %s116
      %p125 = scmp.eq.s32.totalorder %s21, 0
      %p126 = por %p124, %p125
      %p127 = scmp.ne.s32.totalorder %s115, %s116
      %p128 = scmp.eq.s32.totalorder %s22, 1
      %p129 = por %p127, %p128
      %p131 = scmp.ne.s32.totalorder %s116, %s130
      %p132 = scmp.eq.s32.totalorder %s22, 0
      %p133 = por %p131, %p132
      %p134 = scmp.le.s32.totalorder 1, %s16
      %p135 = scmp.lt.s32.totalorder %s16, 3
      %p136 = pnand %p134, %p135
      %p137 = pneg %p136
      // Predicated region
      $region9: #{tpu_custom_call.1} parent=5 // pred_check
        _
      $region10: #{tpu_custom_call.1} parent=5 // pred_check_branch
        %139 = sbr.rel (%p136) target = $region12
      $region11: #{tpu_custom_call.1} parent=5 // pred_region
        %s140 = ssub.s32 %s16, 1
        // Predicated region
        $region13: #{tpu_custom_call.1} parent=11 // pred_check
          %p141 = pneg %p63
        $region14: #{tpu_custom_call.1} parent=11 // pred_check_branch
          %143 = sbr.rel (%p141) target = $region16
        $region15: #{tpu_custom_call.1} parent=11 // pred_region
          %145 = vsyncadd [#allocation7], 0
          %s146 = sshll.u32 %s1, 4
          %s147 = int_to_ptr.hbm [resolvable:$true] %s146
          %s148 = sshll.u32 [#allocation6], 4
          %s149 = int_to_ptr.vmem [resolvable:$true] %s148
          %154 = dma.hbm_to_vmem [thread:$0]  %s147, 128, %s149, [#allocation7], 64, 64, 4
        $region16: #{tpu_custom_call.1} parent=11 // pred_fallthru
          _
        // Predicated region
        $region17: #{tpu_custom_call.1} parent=11 // pred_check
          %p155 = pneg %p84
        $region18: #{tpu_custom_call.1} parent=11 // pred_check_branch
          %157 = sbr.rel (%p155) target = $region20
        $region19: #{tpu_custom_call.1} parent=11 // pred_region
          %159 = vsyncadd [#allocation7], 0
          %s160 = sshll.u32 %s2, 4
          %s161 = int_to_ptr.hbm [resolvable:$true] %s160
          %s162 = sshll.u32 [#allocation8], 4
          %s163 = int_to_ptr.vmem [resolvable:$true] %s162
          %168 = dma.hbm_to_vmem [thread:$0]  %s161, 1024, %s163, [#allocation7], 64, 64, 4
        $region20: #{tpu_custom_call.1} parent=11 // pred_fallthru
          _
        // Predicated region
        $region21: #{tpu_custom_call.1} parent=11 // pred_check
          %p169 = pneg %p105
        $region22: #{tpu_custom_call.1} parent=11 // pred_check_branch
          %171 = sbr.rel (%p169) target = $region24
        $region23: #{tpu_custom_call.1} parent=11 // pred_region
          %173 = vsyncadd [#allocation10], 0
          %s175 = sshll.u32 %s3, 4
          %s176 = int_to_ptr.hbm [resolvable:$true] %s175
          %s177 = sshll.u32 [#allocation9], 4
          %s178 = int_to_ptr.vmem [resolvable:$true] %s177
          %180 = dma.hbm_to_vmem [thread:$0]  %s176, 48, %s178, [#allocation10]
        $region24: #{tpu_custom_call.1} parent=11 // pred_fallthru
          _
      $region12: #{tpu_custom_call.1} parent=5 // pred_fallthru
        _
      %p181 = scmp.lt.s32.totalorder %s16, 2
      // Predicated region
      $region25: #{tpu_custom_call.1} parent=5 // pred_check
        %p182 = pneg %p181
      $region26: #{tpu_custom_call.1} parent=5 // pred_check_branch
        %184 = sbr.rel (%p182) target = $region28
      $region27: #{tpu_custom_call.1} parent=5 // pred_region
        // Predicated region
        $region29: #{tpu_custom_call.1} parent=27 // pred_check
          %p185 = pneg %p36
        $region30: #{tpu_custom_call.1} parent=27 // pred_check_branch
          %187 = sbr.rel (%p185) target = $region32
        $region31: #{tpu_custom_call.1} parent=27 // pred_region
          %s188 = sand.u32 %s26, 1
          %s189 = scalar_lea.sflag [#allocation4], %s188
          %s190 = sand.u32 %s26, 1
          %s191 = smul.addr %s190, 8
          %s192 = scalar_lea.vmem [#allocation3], %s191
          %194 = vsyncadd %s189, 0
          %s195 = smul.addr %s16, 8
          %s196 = scalar_lea.hbm %s0, %s195
          %s198 = sshll.u32 %s196, 4
          %s199 = int_to_ptr.hbm [resolvable:$true] %s198
          %s200 = sshll.u32 %s192, 4
          %s201 = int_to_ptr.vmem [resolvable:$true] %s200
          %203 = dma.hbm_to_vmem [thread:$0]  %s199, 128, %s201, %s189
        $region32: #{tpu_custom_call.1} parent=27 // pred_fallthru
          _
      $region28: #{tpu_custom_call.1} parent=5 // pred_fallthru
        _
      %p204 = scmp.le.s32.totalorder 1, %s16
      %p205 = scmp.lt.s32.totalorder %s16, 3
      %p206 = pnand %p204, %p205
      %p207 = pneg %p206
      // Predicated region
      $region33: #{tpu_custom_call.1} parent=5 // pred_check
        _
      $region34: #{tpu_custom_call.1} parent=5 // pred_check_branch
        %209 = sbr.rel (%p206) target = $region36
      $region35: #{tpu_custom_call.1} parent=5 // pred_region
        %s210 = ssub.s32 %s16, 1
        %s211 = sand.u32 %s29, 1
        %s212 = scalar_lea.sflag [#allocation4], %s211
        %s213 = sand.u32 %s29, 1
        %s214 = smul.addr %s213, 8
        %s215 = scalar_lea.vmem [#allocation3], %s214
        // Predicated region
        $region37: #{tpu_custom_call.1} parent=35 // pred_check
          %p216 = pneg %p42
        $region38: #{tpu_custom_call.1} parent=35 // pred_check_branch
          %218 = sbr.rel (%p216) target = $region40
        $region39: #{tpu_custom_call.1} parent=35 // pred_region
          %220 = dma.done %s212, 128
        $region40: #{tpu_custom_call.1} parent=35 // pred_fallthru
          _
        // Predicated region
        $region41: #{tpu_custom_call.1} parent=35 // pred_check
          %p221 = pneg %p63
        $region42: #{tpu_custom_call.1} parent=35 // pred_check_branch
          %223 = sbr.rel (%p221) target = $region44
        $region43: #{tpu_custom_call.1} parent=35 // pred_region
          %225 = dma.done [#allocation7], 128
        $region44: #{tpu_custom_call.1} parent=35 // pred_fallthru
          _
        // Predicated region
        $region45: #{tpu_custom_call.1} parent=35 // pred_check
          %p226 = pneg %p84
        $region46: #{tpu_custom_call.1} parent=35 // pred_check_branch
          %228 = sbr.rel (%p226) target = $region48
        $region47: #{tpu_custom_call.1} parent=35 // pred_region
          %230 = dma.done [#allocation7], 1024
        $region48: #{tpu_custom_call.1} parent=35 // pred_fallthru
          _
        // Predicated region
        $region49: #{tpu_custom_call.1} parent=35 // pred_check
          %p231 = pneg %p105
        $region50: #{tpu_custom_call.1} parent=35 // pred_check_branch
          %233 = sbr.rel (%p231) target = $region52
        $region51: #{tpu_custom_call.1} parent=35 // pred_region
          %235 = dma.done [#allocation10], 48
        $region52: #{tpu_custom_call.1} parent=35 // pred_fallthru
          _
        %s236 = sand.u32 %s29, 1
        %s237 = scalar_lea.sflag [#allocation4], %s236
        %s238 = sand.u32 %s29, 1
        %s239 = smul.addr %s238, 8
        %s240 = scalar_lea.vmem [#allocation3], %s239
        %p241 = pneg %p42
        %p242 = pneg %p39
        %p243 = pneg %p63
        %p244 = pneg %p60
        %p245 = pneg %p84
        %p246 = pneg %p81
        %p247 = pneg %p105
        %p248 = pneg %p102
        %p249 = pneg %p126
        %p250 = pneg %p123
        %p252 = scmp.eq.s32.totalorder %s21, 0
        // Predicated region
        $region53: #{tpu_custom_call.1} parent=35 // pred_check
          %p253 = pneg %p252
        $region54: #{tpu_custom_call.1} parent=35 // pred_check_branch
          %255 = sbr.rel (%p253) target = $region56
        $region55: #{tpu_custom_call.1} parent=35 // pred_region
          %256 = vst [vmem:[#allocation2] sm:$0x3] 0.0
        $region56: #{tpu_custom_call.1} parent=35 // pred_fallthru
          _
        %v257 = vld [vmem:[#allocation9] sm:$0x1]
        %v258 = vld [vmem:[%s215] sm:$0xff]
        %v259 = vpack.c.bf16 %v258, %v258
        %v260 = vld [vmem:[#allocation6] sm:$0xf]
        %v261 = vld [vmem:[#allocation6 + $0x4] sm:$0xf]
        %v263 = vperm.slane %v257, 0
        %v267 = vunpack.c.l.b16 %v260
        %v268 = vunpack.c.l.b16 %v261
        %v269 = vpack.c.b16 %v268, %v267
        %vm271 = vcmask 130048
        %v273 = vsel %vm271, %v259, 0
        %275 = vmatpush.bf16.msra.mxu0 0
        %276 = vmatpush.bf16.msra.mxu0 0
        %277 = vmatpush.bf16.msra.mxu0 0
        %278 = vmatpush.bf16.msra.mxu0 0
        %279 = vmatpush.bf16.msra.mxu0 0
        %280 = vmatpush.bf16.msra.mxu0 0
        %281 = vmatpush.bf16.msra.mxu0 0
        %282 = vmatpush.bf16.msra.mxu0 %v269
        %283 = vmatmul.bf16.gmra.mxu0 %v273
        %v284 = vpop.f32.mrf.mxu0
        %v285 = vadd.f32 %v263, %v284
        %v286 = vpop.f32.mrf.mxu0
        %287 = vdwg.mxu0
        %v288 = vmax.f32 %v285, 0.0
        %v289 = vpack.c.bf16 %v288, %v288
        %s290 = smul.u32 %s21, 8
        %v291 = vlaneseq
        %v292 = vand.u32 %v291, 127
        %v293 = vstv %s290
        %v294 = vadd.s32 %v293, %v292
        %v295 = vlaneseq
        %v296 = vshrl.u32 %v295, 7
        %v297 = vmul.u32 %v296, 8
        %vm298 = vcmp.ge.s32.totalorder %v294, %v297
        %v299 = vadd.s32 %v297, 8
        %vm300 = vcmp.lt.s32.totalorder %v294, %v299
        %vm301 = vmand %vm298, %vm300
        %v302 = vsel %vm301, 1.0, 0.0
        %v303 = vpack.c.bf16 %v302, %v302
        %v304 = vld [vmem:[#allocation2] sm:$0x3]
        %vm305 = vcmask 64512
        %v307 = vsel %vm305, %v303, 0
        %vm309 = vcmask 1043456
        %v311 = vsel %vm309, %v289, 0
        %313 = vmatpush.bf16.msra.mxu0 0
        %314 = vmatpush.bf16.msra.mxu0 0
        %315 = vmatpush.bf16.msra.mxu0 0
        %316 = vmatpush.bf16.msra.mxu0 0
        %317 = vmatpush.bf16.msra.mxu0 0
        %318 = vmatpush.bf16.msra.mxu0 0
        %319 = vmatpush.bf16.msra.mxu0 0
        %320 = vmatpush.bf16.msra.mxu0 %v311
        %321 = vmatmul.bf16.gmra.mxu0 %v307
        %v322 = vpop.f32.mrf.mxu0
        %v323 = vadd.f32 0.0, %v322
        %v324 = vpop.f32.mrf.mxu0
        %325 = vdwg.mxu0
        %v326 = vadd.f32 %v304, %v323
        %327 = vst [vmem:[#allocation2] sm:$0x3] %v326
        %p328 = scmp.eq.s32.totalorder %s21, 1
        // Predicated region
        $region57: #{tpu_custom_call.1} parent=35 // pred_check
          %p329 = pneg %p328
        $region58: #{tpu_custom_call.1} parent=35 // pred_check_branch
          %331 = sbr.rel (%p329) target = $region60
        $region59: #{tpu_custom_call.1} parent=35 // pred_region
          %v332 = vld [vmem:[#allocation9 + $0x1] sm:$0x1]
          %v333 = vld [vmem:[#allocation2] sm:$0x3]
          %v334 = vmul.f32 %v333, 0.125
          %v335 = vpack.c.bf16 %v334, %v334
          %v336 = vld [vmem:[#allocation8] sm:$0xf]
          %v337 = vld [vmem:[#allocation8 + $0x4] sm:$0xf]
          %v338 = vld [vmem:[#allocation8 + $0x8] sm:$0xf]
          %v339 = vld [vmem:[#allocation8 + $0xc] sm:$0xf]
          %v340 = vld [vmem:[#allocation8 + $0x10] sm:$0xf]
          %v341 = vld [vmem:[#allocation8 + $0x14] sm:$0xf]
          %v342 = vld [vmem:[#allocation8 + $0x18] sm:$0xf]
          %v343 = vld [vmem:[#allocation8 + $0x1c] sm:$0xf]
          %v344 = vld [vmem:[#allocation8 + $0x20] sm:$0xf]
          %v345 = vld [vmem:[#allocation8 + $0x24] sm:$0xf]
          %v346 = vld [vmem:[#allocation8 + $0x28] sm:$0xf]
          %v347 = vld [vmem:[#allocation8 + $0x2c] sm:$0xf]
          %v348 = vld [vmem:[#allocation8 + $0x30] sm:$0xf]
          %v349 = vld [vmem:[#allocation8 + $0x34] sm:$0xf]
          %v350 = vld [vmem:[#allocation8 + $0x38] sm:$0xf]
          %v351 = vld [vmem:[#allocation8 + $0x3c] sm:$0xf]
          %v353 = vperm.slane %v332, 0
          %v371 = vunpack.c.l.b16 %v336
          %v372 = vunpack.c.l.b16 %v337
          %v373 = vunpack.c.l.b16 %v338
          %v374 = vunpack.c.l.b16 %v339
          %v375 = vunpack.c.l.b16 %v340
          %v376 = vunpack.c.l.b16 %v341
          %v377 = vunpack.c.l.b16 %v342
          %v378 = vunpack.c.l.b16 %v343
          %v379 = vunpack.c.l.b16 %v344
          %v380 = vunpack.c.l.b16 %v345
          %v381 = vunpack.c.l.b16 %v346
          %v382 = vunpack.c.l.b16 %v347
          %v383 = vunpack.c.l.b16 %v348
          %v384 = vunpack.c.l.b16 %v349
          %v385 = vunpack.c.l.b16 %v350
          %v386 = vunpack.c.l.b16 %v351
          %v387 = vpack.c.b16 %v372, %v371
          %v388 = vpack.c.b16 %v374, %v373
          %v389 = vpack.c.b16 %v376, %v375
          %v390 = vpack.c.b16 %v378, %v377
          %v391 = vpack.c.b16 %v380, %v379
          %v392 = vpack.c.b16 %v382, %v381
          %v393 = vpack.c.b16 %v384, %v383
          %v394 = vpack.c.b16 %v386, %v385
          %403 = vmatpush.bf16.msra.mxu0 %v394
          %404 = vmatpush.bf16.msra.mxu0 %v393
          %405 = vmatpush.bf16.msra.mxu0 %v392
          %406 = vmatpush.bf16.msra.mxu0 %v391
          %407 = vmatpush.bf16.msra.mxu0 %v390
          %408 = vmatpush.bf16.msra.mxu0 %v389
          %409 = vmatpush.bf16.msra.mxu0 %v388
          %410 = vmatpush.bf16.msra.mxu0 %v387
          %411 = vmatmul.bf16.gmra.mxu0 %v335
          %v412 = vpop.f32.mrf.mxu0
          %v413 = vadd.f32 %v353, %v412
          %v414 = vpop.f32.mrf.mxu0
          %415 = vdwg.mxu0
          %v416 = vpack.c.bf16 %v413, %v413
          %417 = vst [vmem:[#allocation11] sm:$0x1] %v416
        $region60: #{tpu_custom_call.1} parent=35 // pred_fallthru
          _
        // Predicated region
        $region61: #{tpu_custom_call.1} parent=35 // pred_check
          %p418 = pneg %p123
        $region62: #{tpu_custom_call.1} parent=35 // pred_check_branch
          %420 = sbr.rel (%p418) target = $region64
        $region63: #{tpu_custom_call.1} parent=35 // pred_region
          %422 = vsyncadd [#allocation5], 0
          %s424 = sshll.u32 [#allocation11], 4
          %s425 = int_to_ptr.vmem [resolvable:$true] %s424
          %s426 = sshll.u32 %s4, 4
          %s427 = int_to_ptr.hbm [resolvable:$true] %s426
          %429 = dma.vmem_to_hbm [thread:$0]  %s425, 16, %s427, [#allocation5]
        $region64: #{tpu_custom_call.1} parent=35 // pred_fallthru
          _
        // Predicated region
        $region65: #{tpu_custom_call.1} parent=35 // pred_check
          %p430 = pneg %p123
        $region66: #{tpu_custom_call.1} parent=35 // pred_check_branch
          %432 = sbr.rel (%p430) target = $region68
        $region67: #{tpu_custom_call.1} parent=35 // pred_region
          %434 = dma.done [#allocation5], 16
        $region68: #{tpu_custom_call.1} parent=35 // pred_fallthru
          _
      $region36: #{tpu_custom_call.1} parent=5 // pred_fallthru
        _
      %p435 = scmp.le.s32.totalorder 2, %s16
      // Predicated region
      $region69: #{tpu_custom_call.1} parent=5 // pred_check
        %p436 = pneg %p435
      $region70: #{tpu_custom_call.1} parent=5 // pred_check_branch
        %438 = sbr.rel (%p436) target = $region72
      $region71: #{tpu_custom_call.1} parent=5 // pred_region
        %s439 = ssub.s32 %s16, 2
      $region72: #{tpu_custom_call.1} parent=5 // pred_fallthru
        _
    $region6: #{tpu_custom_call.1} parent=1 // loop_footer
      %s20 = sadd.s32 1, %s16
    $region7: #{tpu_custom_call.1} parent=1 // loop_footer_branch
      %15 = sbr.rel target = $region3
    $region8: #{tpu_custom_call.1} parent=1 // loop_exit
      _
    %440 = vsyncpa [#allocation4], 1
    %s441 = scalar_lea.sflag [#allocation4], 1
    %442 = vsyncpa %s441, 1
    %443 = vsyncpa [#allocation7], 1
    %444 = vsyncpa [#allocation10], 1
    %445 = vsyncpa [#allocation5], 1
    %s446 = scalar_lea.sflag [#allocation5], 1
    %447 = vsyncpa %s446, 1

</llo_original>
